<compile_context>
chip_gen: v6e
topology: v6e:2x2x1
jax: 0.10.0
libtpu: 0.0.40
codegen_flags: <defaults>
</compile_context>

<pallas_src>
import functools

import jax
import jax.numpy as jnp
from jax import lax
from jax.experimental import pallas as pl
from jax.experimental.pallas import tpu as pltpu

BN_EPS = 1e-5
_VMEM_TILE_BUDGET = 40 * 1024 * 1024   # tiling budget, safe on all generations
_VMEM_LIMIT_CAP = 48 * 1024 * 1024     # never ask for more than v7x can give


# ---------------------------------------------------------------------------
# Kernel
# ---------------------------------------------------------------------------
def _context_gating_kernel(x_ref, w_ref, gamma_ref, beta_ref, o_ref, acc_ref,
                           *, tn, tk, matmul_dtype):
    j = pl.program_id(0)          # output-feature block
    k = pl.program_id(1)          # contraction block (often collapsed: 1 step)

    # Matmul LHS: slice the resident f32 x block; cast feeds only the MXU.
    x_lhs = x_ref[:, pl.ds(pl.multiple_of(k * tk, tk), tk)].astype(matmul_dtype)
    part = jnp.dot(x_lhs, w_ref[...], preferred_element_type=jnp.float32)

    @pl.when(k == 0)
    def _first():                 # direct write: no zero-init + RMW pass
        acc_ref[...] = part

    @pl.when(k != 0)
    def _accum():
        acc_ref[...] += part

    @pl.when(k == pl.num_programs(1) - 1)
    def _epilogue():
        x1 = acc_ref[...]                                           # (B, tn) f32
        # BatchNorm1d, training mode: biased batch statistics over B.
        mean = jnp.mean(x1, axis=0, keepdims=True)                  # (1, tn)
        centered = x1 - mean
        var = jnp.mean(centered * centered, axis=0, keepdims=True)  # biased
        # Fused BN affine: one mul + one add over the (B, tn) block.
        scale = gamma_ref[...] * lax.rsqrt(var + BN_EPS)            # (1, tn)
        x1n = centered * scale + beta_ref[...]
        # GLU over cat([x, x1], 1) == x * sigmoid(x1); gate uses exact f32 x.
        x_gate = x_ref[:, pl.ds(pl.multiple_of(j * tn, tn), tn)]
        o_ref[...] = (x_gate * jax.nn.sigmoid(x1n)).astype(o_ref.dtype)


# ---------------------------------------------------------------------------
# Tiling heuristics
# ---------------------------------------------------------------------------
def _aligned_divisors(D):
    divs = [t for t in range(128, D + 1, 128) if D % t == 0]
    return divs if divs else [D]


def _vmem_bytes(B, D, tn, tk, w_bytes, out_bytes):
    return (2 * tn * tk * w_bytes          # double-buffered weight tile
            + 2 * B * D * 4                # resident x (counted conservatively)
            + 2 * B * tn * out_bytes       # double-buffered output block
            + B * tn * 4                   # f32 accumulator scratch
            + 4 * 2 * tn * 4)              # gamma / beta blocks


def _select_tiles(B, D, w_bytes, out_bytes):
    # N tile: keep >= 2 blocks when possible so the "parallel" axis can shard
    # across v7x's two TensorCores; lane-aligned (multiple of 128).
    if D >= 256:
        n_cands = [t for t in _aligned_divisors(D) if t <= D // 2]
        tn = max(n_cands) if n_cands else D
    else:
        tn = D
    # K tile: as large as fits (ideally tk == D -> contiguous row-block weight
    # DMA per N block, no cross-step accumulation, minimal grid overhead).
    cands = sorted(set(_aligned_divisors(D) + [D]), reverse=True)
    tk = cands[-1]
    for cand in cands:
        if _vmem_bytes(B, D, tn, cand, w_bytes, out_bytes) <= _VMEM_TILE_BUDGET:
            tk = cand
            break
    return tn, tk


# ---------------------------------------------------------------------------
# Wrapper
# ---------------------------------------------------------------------------
def context_gating(x, w, b, gamma, beta, *, tn=None, tk=None,
                   use_bf16_matmul=True):
    """Context_Gating forward.

    x: (B, D) f32; w: (D, D) PyTorch-style (out, in); b/gamma/beta: (D,).
    `b` is accepted for API parity but is a mathematical no-op under
    training-mode BatchNorm (mean subtraction cancels any per-feature shift).
    """
    del b  # exactly cancelled by training-mode BN mean subtraction
    B, D = x.shape
    assert w.shape == (D, D)

    matmul_dtype = jnp.bfloat16 if use_bf16_matmul else jnp.float32
    w_bytes = 2 if use_bf16_matmul else 4
    out_bytes = jnp.dtype(x.dtype).itemsize

    auto_tn, auto_tk = _select_tiles(B, D, w_bytes, out_bytes)
    tn = auto_tn if tn is None else min(tn, D)
    tk = auto_tk if tk is None else min(tk, D)
    assert D % tn == 0 and D % tk == 0, "D must be divisible by the tile sizes"
    assert tn == D or tn % 128 == 0
    assert tk == D or tk % 128 == 0
    n_blocks, k_blocks = D // tn, D // tk

    # Transpose once to (in, out) and cast BEFORE the pallas_call: the DMA
    # streams bf16 (half the bytes) and the MXU gets a plain (B,TK)@(TK,TN).
    # TODO(synk): in a real model store the weight pre-transposed / pre-cast so
    #             this layout change is a one-time cost, not per call.
    w_t = jnp.swapaxes(w, 0, 1).astype(matmul_dtype)

    g2 = gamma.reshape(1, D).astype(jnp.float32)
    be2 = beta.reshape(1, D).astype(jnp.float32)

    kernel = functools.partial(_context_gating_kernel, tn=tn, tk=tk,
                               matmul_dtype=matmul_dtype)

    grid_spec = pltpu.PrefetchScalarGridSpec(
        num_scalar_prefetch=0,
        grid=(n_blocks, k_blocks),                      # reduction axis last
        in_specs=[
            # x resident across the whole grid (read from HBM exactly once).
            pl.BlockSpec((B, D), lambda j, k: (0, 0)),
            # Pre-transposed weight: (tk, tn) tile of (D_in, D_out).
            pl.BlockSpec((tk, tn), lambda j, k: (k, j)),
            # Per-feature BN params.
            pl.BlockSpec((1, tn), lambda j, k: (0, j)),
            pl.BlockSpec((1, tn), lambda j, k: (0, j)),
        ],
        out_specs=pl.BlockSpec((B, tn), lambda j, k: (0, j)),
        scratch_shapes=[pltpu.VMEM((B, tn), jnp.float32)],
    )

    needed = _vmem_bytes(B, D, tn, tk, w_bytes, out_bytes)
    vmem_limit = int(min(max(needed * 5 // 4 + (2 << 20), 16 << 20),
                         _VMEM_LIMIT_CAP))

    cost = pl.CostEstimate(
        flops=2 * B * D * D,
        transcendentals=B * D,                          # sigmoid (+ rsqrt)
        bytes_accessed=D * D * w_bytes + 4 * (B * D + 2 * D) + B * D * out_bytes,
    )

    return pl.pallas_call(
        kernel,
        out_shape=jax.ShapeDtypeStruct((B, D), x.dtype),
        grid_spec=grid_spec,
        compiler_params=pltpu.CompilerParams(
            # N parallel (megacore shard on v7x), K arbitrary (accumulator).
            dimension_semantics=("parallel", "arbitrary"),
            vmem_limit_bytes=vmem_limit,
        ),
        cost_estimate=cost,
    )(x, w_t, g2, be2)


def context_gating_ref(x, w, b, gamma, beta):
    """Pure-JAX reference matching the PyTorch module (training-mode BN)."""
    x1 = x @ w.T + b
    mean = jnp.mean(x1, axis=0, keepdims=True)
    var = jnp.mean((x1 - mean) ** 2, axis=0, keepdims=True)
    x1n = (x1 - mean) / jnp.sqrt(var + BN_EPS) * gamma + beta
    return x * jax.nn.sigmoid(x1n)


if __name__ == "__main__":
    # Small but tiling-exercising shapes: tn=256 (2 N blocks), tk=D (K collapsed).
    B, D = 8, 512

    key = jax.random.PRNGKey(0)
    kx, kw, kb, kg, kbe = jax.random.split(key, 5)

    x = jax.random.normal(kx, (B, D), dtype=jnp.float32)
    bound = 1.0 / (D ** 0.5)
    w = jax.random.uniform(kw, (D, D), minval=-bound, maxval=bound,
                           dtype=jnp.float32)
    b = jax.random.uniform(kb, (D,), minval=-bound, maxval=bound,
                           dtype=jnp.float32)
    gamma = 1.0 + 0.1 * jax.random.normal(kg, (D,), dtype=jnp.float32)
    beta = 0.1 * jax.random.normal(kbe, (D,), dtype=jnp.float32)

    ref = context_gating_ref(x, w, b, gamma, beta)

    # f32 matmul path: tight correctness check.
    out_f32 = jax.block_until_ready(
        context_gating(x, w, b, gamma, beta, use_bf16_matmul=False))
    assert out_f32.shape == (B, D)
    assert jnp.allclose(out_f32, ref, atol=1e-4, rtol=1e-4), "f32 mismatch"

    # Default bf16-weight path (halves D*D HBM traffic): looser tolerance.
    out_bf16 = jax.block_until_ready(context_gating(x, w, b, gamma, beta))
    assert out_bf16.shape == (B, D)
    assert jnp.allclose(out_bf16, ref, atol=3e-2, rtol=3e-2), "bf16 mismatch"

    print("KERNEL_OK")
</pallas_src>

<mosaic_0001>
module attributes {stable_mosaic.version = 11 : i64} {
  func.func @_context_gating_kernel(%arg0: i32, %arg1: i32, %arg2: memref<8x512xf32, #tpu.memory_space<vmem>>, %arg3: memref<512x256xf32, #tpu.memory_space<vmem>>, %arg4: memref<1x256xf32, #tpu.memory_space<vmem>>, %arg5: memref<1x256xf32, #tpu.memory_space<vmem>>, %arg6: memref<8x256xf32, #tpu.memory_space<vmem>>, %arg7: memref<8x256xf32, #tpu.memory_space<vmem>>) attributes {dimension_semantics = [#tpu.dimension_semantics<parallel>, #tpu.dimension_semantics<arbitrary>], iteration_bounds = array<i64: 2, 1>, scalar_prefetch = 0 : i64, scratch_operands = 1 : i64, tpu.core_type = #tpu.core_type<tc>, window_params = [{pipeline_mode = #tpu.pipeline_mode<synchronous>, transform_indices = @transform_0, window_bounds = array<i64: 8, 512>}, {transform_indices = @transform_1, window_bounds = array<i64: 512, 256>}, {transform_indices = @transform_2, window_bounds = array<i64: 1, 256>}, {transform_indices = @transform_3, window_bounds = array<i64: 1, 256>}, {transform_indices = @transform_4, window_bounds = array<i64: 8, 256>}]} {
    %c512_i32 = arith.constant 512 : i32
    %0 = arith.muli %arg1, %c512_i32 : i32
    %1 = tpu.assume_multiple %0, 512 : i32
    %c0 = arith.constant 0 : index
    %2 = arith.index_cast %1 : i32 to index
    %3 = vector.load %arg2[%c0, %2] : memref<8x512xf32, #tpu.memory_space<vmem>>, vector<8x512xf32>
    %c0_0 = arith.constant 0 : index
    %c0_1 = arith.constant 0 : index
    %4 = vector.load %arg3[%c0_0, %c0_1] : memref<512x256xf32, #tpu.memory_space<vmem>>, vector<512x256xf32>
    %cst = arith.constant dense<0.000000e+00> : vector<8x256xf32>
    %5 = tpu.matmul %3, %4, %cst {dimension_numbers = #tpu.dot_dimension_numbers<[1], [0], [0], [1], [0, 0, 1, 1], [], []>} : vector<8x512xf32>, vector<512x256xf32>, vector<8x256xf32> -> vector<8x256xf32>
    %c0_i32 = arith.constant 0 : i32
    %6 = arith.cmpi eq, %arg1, %c0_i32 : i32
    %7 = arith.extui %6 : i1 to i32
    %c0_i32_2 = arith.constant 0 : i32
    %8 = arith.cmpi ne, %7, %c0_i32_2 : i32
    scf.if %8 {
      %c0_7 = arith.constant 0 : index
      %c0_8 = arith.constant 0 : index
      %15 = vector.load %arg7[%c0_7, %c0_8] : memref<8x256xf32, #tpu.memory_space<vmem>>, vector<8x256xf32>
      tpu.vector_store %arg7[%c0_7, %c0_8], %5 {strides = array<i32>} : memref<8x256xf32, #tpu.memory_space<vmem>>, vector<8x256xf32>,
    } else {
    }
    %c0_i32_3 = arith.constant 0 : i32
    %9 = arith.cmpi ne, %arg1, %c0_i32_3 : i32
    %10 = arith.extui %9 : i1 to i32
    %c0_i32_4 = arith.constant 0 : i32
    %11 = arith.cmpi ne, %10, %c0_i32_4 : i32
    scf.if %11 {
      %c0_7 = arith.constant 0 : index
      %c0_8 = arith.constant 0 : index
      %15 = vector.load %arg7[%c0_7, %c0_8] : memref<8x256xf32, #tpu.memory_space<vmem>>, vector<8x256xf32>
      %16 = arith.addf %15, %5 : vector<8x256xf32>
      %c0_9 = arith.constant 0 : index
      %c0_10 = arith.constant 0 : index
      %17 = vector.load %arg7[%c0_9, %c0_10] : memref<8x256xf32, #tpu.memory_space<vmem>>, vector<8x256xf32>
      tpu.vector_store %arg7[%c0_9, %c0_10], %16 {strides = array<i32>} : memref<8x256xf32, #tpu.memory_space<vmem>>, vector<8x256xf32>,
    } else {
    }
    %c0_i32_5 = arith.constant 0 : i32
    %12 = arith.cmpi eq, %arg1, %c0_i32_5 : i32
    %13 = arith.extui %12 : i1 to i32
    %c0_i32_6 = arith.constant 0 : i32
    %14 = arith.cmpi ne, %13, %c0_i32_6 : i32
    scf.if %14 {
      %c0_7 = arith.constant 0 : index
      %c0_8 = arith.constant 0 : index
      %15 = vector.load %arg7[%c0_7, %c0_8] : memref<8x256xf32, #tpu.memory_space<vmem>>, vector<8x256xf32>
      %cst_9 = arith.constant dense<0.000000e+00> : vector<256xf32>
      %16 = vector.multi_reduction <add>, %15, %cst_9 [0] : vector<8x256xf32> to vector<256xf32>
      %17 = vector.shape_cast %16 : vector<256xf32> to vector<1x256xf32>
      %cst_10 = arith.constant 8.000000e+00 : f32
      %18 = vector.broadcast %cst_10 : f32 to vector<1x256xf32>
      %19 = arith.divf %17, %18 : vector<1x256xf32>
      %20 = vector.broadcast %19 : vector<1x256xf32> to vector<8x256xf32>
      %21 = arith.subf %15, %20 : vector<8x256xf32>
      %22 = arith.mulf %21, %21 : vector<8x256xf32>
      %cst_11 = arith.constant dense<0.000000e+00> : vector<256xf32>
      %23 = vector.multi_reduction <add>, %22, %cst_11 [0] : vector<8x256xf32> to vector<256xf32>
      %24 = vector.shape_cast %23 : vector<256xf32> to vector<1x256xf32>
      %cst_12 = arith.constant 8.000000e+00 : f32
      %25 = vector.broadcast %cst_12 : f32 to vector<1x256xf32>
      %26 = arith.divf %24, %25 : vector<1x256xf32>
      %c0_13 = arith.constant 0 : index
      %c0_14 = arith.constant 0 : index
      %27 = vector.load %arg4[%c0_13, %c0_14] : memref<1x256xf32, #tpu.memory_space<vmem>>, vector<1x256xf32>
      %cst_15 = arith.constant 9.99999974E-6 : f32
      %28 = vector.broadcast %cst_15 : f32 to vector<1x256xf32>
      %29 = arith.addf %26, %28 : vector<1x256xf32>
      %30 = math.rsqrt %29 : vector<1x256xf32>
      %31 = arith.mulf %27, %30 : vector<1x256xf32>
      %32 = vector.broadcast %31 : vector<1x256xf32> to vector<8x256xf32>
      %33 = arith.mulf %21, %32 : vector<8x256xf32>
      %c0_16 = arith.constant 0 : index
      %c0_17 = arith.constant 0 : index
      %34 = vector.load %arg5[%c0_16, %c0_17] : memref<1x256xf32, #tpu.memory_space<vmem>>, vector<1x256xf32>
      %35 = vector.broadcast %34 : vector<1x256xf32> to vector<8x256xf32>
      %36 = arith.addf %33, %35 : vector<8x256xf32>
      %c256_i32 = arith.constant 256 : i32
      %37 = arith.muli %arg0, %c256_i32 : i32
      %38 = tpu.assume_multiple %37, 256 : i32
      %c0_18 = arith.constant 0 : index
      %39 = arith.index_cast %38 : i32 to index
      %40 = vector.load %arg2[%c0_18, %39] : memref<8x512xf32, #tpu.memory_space<vmem>>, vector<8x256xf32>
      %41 = arith.negf %36 : vector<8x256xf32>
      %42 = math.exp %41 : vector<8x256xf32>
      %cst_19 = arith.constant 1.000000e+00 : f32
      %43 = vector.broadcast %cst_19 : f32 to vector<8x256xf32>
      %44 = arith.addf %43, %42 : vector<8x256xf32>
      %45 = arith.divf %43, %44 : vector<8x256xf32>
      %46 = arith.mulf %40, %45 : vector<8x256xf32>
      %c0_20 = arith.constant 0 : index
      %c0_21 = arith.constant 0 : index
      %47 = vector.load %arg6[%c0_20, %c0_21] : memref<8x256xf32, #tpu.memory_space<vmem>>, vector<8x256xf32>
      tpu.vector_store %arg6[%c0_20, %c0_21], %46 {strides = array<i32>} : memref<8x256xf32, #tpu.memory_space<vmem>>, vector<8x256xf32>,
    } else {
    }
    return
  }
  func.func @transform_0(%arg0: i32, %arg1: i32) -> (i32, i32) {
    %c0_i32 = arith.constant 0 : i32
    %c0_i32_0 = arith.constant 0 : i32
    %c0_i32_1 = arith.constant 0 : i32
    return %c0_i32, %c0_i32_0 : i32, i32
  }
  func.func @transform_1(%arg0: i32, %arg1: i32) -> (i32, i32) {
    %c0_i32 = arith.constant 0 : i32
    return %arg1, %arg0 : i32, i32
  }
  func.func @transform_2(%arg0: i32, %arg1: i32) -> (i32, i32) {
    %c0_i32 = arith.constant 0 : i32
    %c0_i32_0 = arith.constant 0 : i32
    return %c0_i32, %arg0 : i32, i32
  }
  func.func @transform_3(%arg0: i32, %arg1: i32) -> (i32, i32) {
    %c0_i32 = arith.constant 0 : i32
    %c0_i32_0 = arith.constant 0 : i32
    return %c0_i32, %arg0 : i32, i32
  }
  func.func @transform_4(%arg0: i32, %arg1: i32) -> (i32, i32) {
    %c0_i32 = arith.constant 0 : i32
    %c0_i32_0 = arith.constant 0 : i32
    return %c0_i32, %arg0 : i32, i32
  }
}

</mosaic_0001>

<llo_original>
// kernel: tpu_custom_call.1
$region0: #{tpu_custom_call.1}
  #allocation0 [shape = 'u32[]', space=smem, size = 0x4, offset = 0x4, fixed_abs, tag = 'smem constant byte address 0x4 - core index']
  #allocation1 [shape = 'u32[144,128]{1,0:T(1,128)}', space=vmem, size = 0x12000, scoped, tag = 'internal scratch']
  #allocation2 [shape = 'f32[8,256]{1,0:T(8,128)}', space=vmem, size = 0x2000, scoped, tag = 'scratch operand']
  %s0 = inlined_call_operand.hbm [shape: f32[8,512], index: 0, kind: input, shape index: {}]
  %s1 = inlined_call_operand.hbm [shape: f32[512,512], index: 1, kind: input, shape index: {}]
  %s2 = inlined_call_operand.hbm [shape: f32[1,512], index: 2, kind: input, shape index: {}]
  %s3 = inlined_call_operand.vmem [shape: f32[1,512], index: 3, kind: input, shape index: {}]
  %s4 = inlined_call_operand.hbm [shape: f32[8,512], index: 4, kind: output, shape index: {}]
  %s5 = sld [smem:[#allocation0]]
  $region73: #{tpu_custom_call.1} parent=0
    _
  %s7 = ssub.s32 1, %s5
  %s8 = scalar_select 0, %s7, %s5
  $region1: #{tpu_custom_call.1} parent=0
    #allocation3 [shape = 'u8[16384]{0}', space=vmem, size = 0x4000, scoped, tag = 'input window, operand 0, single buffered']
    #allocation4 [shape = 's32[2]{0}', space=sflag, size = 0x8, scoped, tag = 'scoped memory for tpu_custom_call.1']
    #allocation5 [shape = 's32[2]{0}', space=sflag, size = 0x8, scoped, tag = 'scoped memory for tpu_custom_call.1']
    #allocation6 [shape = 'u8[1048576]{0}', space=vmem, size = 0x100000, scoped, tag = 'input window, operand 1']
    #allocation7 [shape = 's32[2]{0}', space=sflag, size = 0x8, scoped, tag = 'scoped memory for tpu_custom_call.1']
    #allocation8 [shape = 'u8[2048]{0}', space=vmem, size = 0x800, scoped, tag = 'input window, operand 2']
    #allocation9 [shape = 'u8[16384]{0}', space=vmem, size = 0x4000, scoped, tag = 'output window, operand 0']
    %9 = vsyncpa [#allocation4], 0
    %10 = vsyncpa [#allocation7], 0
    %s11 = scalar_lea.sflag [#allocation7], 1
    %12 = vsyncpa %s11, 0
    %13 = vsyncpa [#allocation5], 0
    %s14 = scalar_lea.sflag [#allocation5], 1
    %15 = vsyncpa %s14, 0
    loop: start=0, step=1, limit=4
    $region2: #{tpu_custom_call.1} parent=1 // loop_pre_header
      _
    $region3: #{tpu_custom_call.1} parent=1 // loop_header
      %s17 = sphi 0, %s21
      %p18 = scmp.ge.s32.totalorder %s17, 4
      %s24 = sphi 0, %s36
      %s25 = sphi 0, %s32
      %s26 = sphi 0, %s24
      %s27 = sphi 0, %s25
      %s28 = sphi 0, %s26
      %s29 = sphi 0, %s27
      %s37 = sphi 0, %s37
      %s39 = sphi 0, %s37
      %s40 = sphi 0, %s39
      %s54 = sphi 0, %s40
      %s62 = sphi 0, %s64
      %s65 = sphi 0, %s62
      %s66 = sphi 0, %s65
      %s82 = sphi 0, %s66
      %s88 = sphi 0, %s90
      %s91 = sphi 0, %s88
      %s92 = sphi 0, %s91
      %s108 = sphi 0, %s92
      %s114 = sphi 0, %s116
      %s117 = sphi 0, %s114
      %s118 = sphi 0, %s117
      %s134 = sphi 0, %s118
      %s140 = sphi 0, %s142
      %s143 = sphi 0, %s140
      %s144 = sphi 0, %s143
      %s160 = sphi 0, %s144
    $region4: #{tpu_custom_call.1} parent=1 // loop_header_branch
      %20 = sbr.rel (%p18) target = $region8
    $region5: #{tpu_custom_call.1} parent=1 // loop_body
      %s22 = ssub.s32 %s17, 1
      %s23 = ssub.s32 %s17, 2
      %s30 = sadd.s32 1, %s25
      %p31 = scmp.ge.s32.totalorder %s30, 1
      %s32 = scalar_select %p31, 0, %s30
      %s33 = sadd.s32 1, %s24
      %s34 = scalar_select %p31, %s33, %s24
      %p35 = scmp.ge.s32.totalorder %s34, 2
      %s36 = scalar_select %p35, 0, %s34
      %s38 = sadd.s32 %s37, 1
      %p41 = scmp.eq.s32.totalorder %s17, 1
      %p42 = scmp.ne.s32.totalorder %s37, %s39
      %p43 = scmp.eq.s32.totalorder %s17, 0
      %p44 = por %p42, %p43
      %p45 = scmp.ne.s32.totalorder %s37, %s39
      %p46 = scmp.eq.s32.totalorder %s22, 1
      %p47 = por %p45, %p46
      %p48 = scmp.ne.s32.totalorder %s39, %s40
      %p49 = scmp.eq.s32.totalorder %s22, 0
      %p50 = por %p48, %p49
      %p51 = scmp.ne.s32.totalorder %s39, %s40
      %p52 = scmp.eq.s32.totalorder %s23, 1
      %p53 = por %p51, %p52
      %p55 = scmp.ne.s32.totalorder %s40, %s54
      %p56 = scmp.eq.s32.totalorder %s23, 0
      %p57 = por %p55, %p56
      %s58 = ssub.s32 %s25, %s32
      %s59 = ssub.s32 %s24, %s36
      %s60 = sor.u32 %s58, %s59
      %p61 = scmp.eq.s32.totalorder %s60, 0
      %s63 = sadd.s32 %s62, 1
      %s64 = scalar_select %p61, %s62, %s63
      %p67 = pneg %p61
      %p68 = scmp.eq.s32.totalorder %s17, 1
      %p69 = por %p67, %p68
      %p70 = scmp.ne.s32.totalorder %s62, %s65
      %p71 = scmp.eq.s32.totalorder %s17, 0
      %p72 = por %p70, %p71
      %p73 = scmp.ne.s32.totalorder %s62, %s65
      %p74 = scmp.eq.s32.totalorder %s22, 1
      %p75 = por %p73, %p74
      %p76 = scmp.ne.s32.totalorder %s65, %s66
      %p77 = scmp.eq.s32.totalorder %s22, 0
      %p78 = por %p76, %p77
      %p79 = scmp.ne.s32.totalorder %s65, %s66
      %p80 = scmp.eq.s32.totalorder %s23, 1
      %p81 = por %p79, %p80
      %p83 = scmp.ne.s32.totalorder %s66, %s82
      %p84 = scmp.eq.s32.totalorder %s23, 0
      %p85 = por %p83, %p84
      %s86 = ssub.s32 %s24, %s36
      %p87 = scmp.eq.s32.totalorder %s86, 0
      %s89 = sadd.s32 %s88, 1
      %s90 = scalar_select %p87, %s88, %s89
      %p93 = pneg %p87
      %p94 = scmp.eq.s32.totalorder %s17, 1
      %p95 = por %p93, %p94
      %p96 = scmp.ne.s32.totalorder %s88, %s91
      %p97 = scmp.eq.s32.totalorder %s17, 0
      %p98 = por %p96, %p97
      %p99 = scmp.ne.s32.totalorder %s88, %s91
      %p100 = scmp.eq.s32.totalorder %s22, 1
      %p101 = por %p99, %p100
      %p102 = scmp.ne.s32.totalorder %s91, %s92
      %p103 = scmp.eq.s32.totalorder %s22, 0
      %p104 = por %p102, %p103
      %p105 = scmp.ne.s32.totalorder %s91, %s92
      %p106 = scmp.eq.s32.totalorder %s23, 1
      %p107 = por %p105, %p106
      %p109 = scmp.ne.s32.totalorder %s92, %s108
      %p110 = scmp.eq.s32.totalorder %s23, 0
      %p111 = por %p109, %p110
      %s112 = ssub.s32 %s24, %s36
      %p113 = scmp.eq.s32.totalorder %s112, 0
      %s115 = sadd.s32 %s114, 1
      %s116 = scalar_select %p113, %s114, %s115
      %p119 = pneg %p113
      %p120 = scmp.eq.s32.totalorder %s17, 1
      %p121 = por %p119, %p120
      %p122 = scmp.ne.s32.totalorder %s114, %s117
      %p123 = scmp.eq.s32.totalorder %s17, 0
      %p124 = por %p122, %p123
      %p125 = scmp.ne.s32.totalorder %s114, %s117
      %p126 = scmp.eq.s32.totalorder %s22, 1
      %p127 = por %p125, %p126
      %p128 = scmp.ne.s32.totalorder %s117, %s118
      %p129 = scmp.eq.s32.totalorder %s22, 0
      %p130 = por %p128, %p129
      %p131 = scmp.ne.s32.totalorder %s117, %s118
      %p132 = scmp.eq.s32.totalorder %s23, 1
      %p133 = por %p131, %p132
      %p135 = scmp.ne.s32.totalorder %s118, %s134
      %p136 = scmp.eq.s32.totalorder %s23, 0
      %p137 = por %p135, %p136
      %s138 = ssub.s32 %s24, %s36
      %p139 = scmp.eq.s32.totalorder %s138, 0
      %s141 = sadd.s32 %s140, 1
      %s142 = scalar_select %p139, %s140, %s141
      %p145 = pneg %p139
      %p146 = scmp.eq.s32.totalorder %s17, 1
      %p147 = por %p145, %p146
      %p148 = scmp.ne.s32.totalorder %s140, %s143
      %p149 = scmp.eq.s32.totalorder %s17, 0
      %p150 = por %p148, %p149
      %p151 = scmp.ne.s32.totalorder %s140, %s143
      %p152 = scmp.eq.s32.totalorder %s22, 1
      %p153 = por %p151, %p152
      %p154 = scmp.ne.s32.totalorder %s143, %s144
      %p155 = scmp.eq.s32.totalorder %s22, 0
      %p156 = por %p154, %p155
      %p157 = scmp.ne.s32.totalorder %s143, %s144
      %p158 = scmp.eq.s32.totalorder %s23, 1
      %p159 = por %p157, %p158
      %p161 = scmp.ne.s32.totalorder %s144, %s160
      %p162 = scmp.eq.s32.totalorder %s23, 0
      %p163 = por %p161, %p162
      %p164 = scmp.le.s32.totalorder 1, %s17
      %p165 = scmp.lt.s32.totalorder %s17, 3
      %p166 = pnand %p164, %p165
      %p167 = pneg %p166
      // Predicated region
      $region9: #{tpu_custom_call.1} parent=5 // pred_check
        _
      $region10: #{tpu_custom_call.1} parent=5 // pred_check_branch
        %169 = sbr.rel (%p166) target = $region12
      $region11: #{tpu_custom_call.1} parent=5 // pred_region
        %s170 = ssub.s32 %s17, 1
        // Predicated region
        $region13: #{tpu_custom_call.1} parent=11 // pred_check
          %p171 = pneg %p50
        $region14: #{tpu_custom_call.1} parent=11 // pred_check_branch
          %173 = sbr.rel (%p171) target = $region16
        $region15: #{tpu_custom_call.1} parent=11 // pred_region
          %s175 = ssub.s32 512, 512
          %176 = vsyncadd [#allocation4], %s175
          %s178 = sshll.u32 [#allocation3], 4
          %s179 = int_to_ptr.vmem [resolvable:$true] %s178
          %181 = dma.hbm_to_vmem [thread:$0]  %s0, 512, %s179, [#allocation4]
        $region16: #{tpu_custom_call.1} parent=11 // pred_fallthru
          _
      $region12: #{tpu_custom_call.1} parent=5 // pred_fallthru
        _
      %p182 = scmp.lt.s32.totalorder %s17, 2
      // Predicated region
      $region17: #{tpu_custom_call.1} parent=5 // pred_check
        %p183 = pneg %p182
      $region18: #{tpu_custom_call.1} parent=5 // pred_check_branch
        %185 = sbr.rel (%p183) target = $region20
      $region19: #{tpu_custom_call.1} parent=5 // pred_region
        // Predicated region
        $region21: #{tpu_custom_call.1} parent=19 // pred_check
          %p186 = pneg %p72
        $region22: #{tpu_custom_call.1} parent=19 // pred_check_branch
          %188 = sbr.rel (%p186) target = $region24
        $region23: #{tpu_custom_call.1} parent=19 // pred_region
          %s189 = sand.u32 %s17, 1
          %s190 = scalar_lea.sflag [#allocation7], %s189
          %s191 = sand.u32 %s62, 1
          %s192 = smul.addr %s191, 1024
          %s193 = scalar_lea.vmem [#allocation6], %s192
          %s194 = smul.u32 64, %s25
          %s195 = smul.u32 2, %s24
          %s197 = ssub.s32 16384, 16384
          %198 = vsyncadd %s190, %s197
          %s199 = smul.addr %s194, 4
          %s200 = sadd.s32 %s195, %s199
          %s201 = smul.addr %s200, 128
          %s202 = scalar_lea.hbm %s1, %s201
          %s203 = sshll.u32 %s193, 4
          %s204 = int_to_ptr.vmem [resolvable:$true] %s203
          %209 = dma.hbm_to_vmem [thread:$0]  %s202, 16384, %s204, %s190, 512, 256, 16
        $region24: #{tpu_custom_call.1} parent=19 // pred_fallthru
          _
        // Predicated region
        $region25: #{tpu_custom_call.1} parent=19 // pred_check
          %p210 = pneg %p98
        $region26: #{tpu_custom_call.1} parent=19 // pred_check_branch
          %212 = sbr.rel (%p210) target = $region28
        $region27: #{tpu_custom_call.1} parent=19 // pred_region
          %s213 = sand.u32 %s17, 1
          %s214 = scalar_lea.sflag [#allocation7], %s213
          %s215 = sand.u32 %s88, 1
          %s216 = smul.addr %s215, 2
          %s217 = scalar_lea.vmem [#allocation8], %s216
          %s218 = smul.u32 2, %s24
          %s220 = ssub.s32 32, 32
          %221 = vsyncadd %s214, %s220
          %s222 = smul.addr %s218, 16
          %s223 = scalar_lea.hbm %s2, %s222
          %s225 = sshll.u32 %s217, 4
          %s226 = int_to_ptr.vmem [resolvable:$true] %s225
          %228 = dma.hbm_to_vmem [thread:$0]  %s223, 32, %s226, %s214
        $region28: #{tpu_custom_call.1} parent=19 // pred_fallthru
          _
        // Predicated region
        $region29: #{tpu_custom_call.1} parent=19 // pred_check
          %p229 = pneg %p124
        $region30: #{tpu_custom_call.1} parent=19 // pred_check_branch
          %231 = sbr.rel (%p229) target = $region32
        $region31: #{tpu_custom_call.1} parent=19 // pred_region
          %s232 = smul.u32 2, %s24
          %p233 = scmp.lt.s32.totalorder %s232, 3
          %s234 = scalar_select %p233, %s232, 3
          %s235 = scalar_lea.vmem %s3, %s234
          %s236 = smul.u32 2, %s24
        $region32: #{tpu_custom_call.1} parent=19 // pred_fallthru
          _
      $region20: #{tpu_custom_call.1} parent=5 // pred_fallthru
        _
      %p237 = scmp.le.s32.totalorder 1, %s17
      %p238 = scmp.lt.s32.totalorder %s17, 3
      %p239 = pnand %p237, %p238
      %p240 = pneg %p239
      // Predicated region
      $region33: #{tpu_custom_call.1} parent=5 // pred_check
        _
      $region34: #{tpu_custom_call.1} parent=5 // pred_check_branch
        %242 = sbr.rel (%p239) target = $region36
      $region35: #{tpu_custom_call.1} parent=5 // pred_region
        %s243 = ssub.s32 %s17, 1
        // Predicated region
        $region37: #{tpu_custom_call.1} parent=35 // pred_check
          %p244 = pneg %p50
        $region38: #{tpu_custom_call.1} parent=35 // pred_check_branch
          %246 = sbr.rel (%p244) target = $region40
        $region39: #{tpu_custom_call.1} parent=35 // pred_region
          %247 = dma.done [#allocation4], 512
        $region40: #{tpu_custom_call.1} parent=35 // pred_fallthru
          _
        %s248 = sand.u32 %s22, 1
        %s249 = scalar_lea.sflag [#allocation7], %s248
        %s250 = sand.u32 %s65, 1
        %s251 = smul.addr %s250, 1024
        %s252 = scalar_lea.vmem [#allocation6], %s251
        // Predicated region
        $region41: #{tpu_custom_call.1} parent=35 // pred_check
          %p253 = pneg %p78
        $region42: #{tpu_custom_call.1} parent=35 // pred_check_branch
          %255 = sbr.rel (%p253) target = $region44
        $region43: #{tpu_custom_call.1} parent=35 // pred_region
          %256 = dma.done %s249, 16384
        $region44: #{tpu_custom_call.1} parent=35 // pred_fallthru
          _
        %s257 = sand.u32 %s22, 1
        %s258 = scalar_lea.sflag [#allocation7], %s257
        %s259 = sand.u32 %s91, 1
        %s260 = smul.addr %s259, 2
        %s261 = scalar_lea.vmem [#allocation8], %s260
        // Predicated region
        $region45: #{tpu_custom_call.1} parent=35 // pred_check
          %p262 = pneg %p104
        $region46: #{tpu_custom_call.1} parent=35 // pred_check_branch
          %264 = sbr.rel (%p262) target = $region48
        $region47: #{tpu_custom_call.1} parent=35 // pred_region
          %265 = dma.done %s258, 32
        $region48: #{tpu_custom_call.1} parent=35 // pred_fallthru
          _
        %p266 = pneg %p50
        %p267 = pneg %p47
        %s268 = sand.u32 %s22, 1
        %s269 = scalar_lea.sflag [#allocation7], %s268
        %s270 = sand.u32 %s65, 1
        %s271 = smul.addr %s270, 1024
        %s272 = scalar_lea.vmem [#allocation6], %s271
        %p273 = pneg %p78
        %p274 = pneg %p75
        %s275 = sand.u32 %s22, 1
        %s276 = scalar_lea.sflag [#allocation7], %s275
        %s277 = sand.u32 %s91, 1
        %s278 = smul.addr %s277, 2
        %s279 = scalar_lea.vmem [#allocation8], %s278
        %p280 = pneg %p104
        %p281 = pneg %p101
        %s282 = smul.u32 2, %s26
        %p283 = scmp.lt.s32.totalorder %s282, 3
        %s284 = scalar_select %p283, %s282, 3
        %s285 = scalar_lea.vmem %s3, %s284
        %p286 = pneg %p130
        %p287 = pneg %p127
        %p288 = pneg %p156
        %p289 = pneg %p153
        %s290 = sand.u32 %s143, 1
        %s291 = scalar_lea.sflag [#allocation5], %s290
        %s292 = sand.u32 %s143, 1
        %s293 = smul.addr %s292, 16
        %s294 = scalar_lea.vmem [#allocation9], %s293
        %s295 = smul.u32 64, %s27
        %s296 = smul.u32 2, %s26
        %s297 = smul.u32 2, %s26
        %s298 = smul.u32 2, %s26
        %p299 = scmp.lt.s32.totalorder %s298, 3
        %s300 = scalar_select %p299, %s298, 3
        %s301 = scalar_lea.vmem %s3, %s300
        %s302 = smul.u32 2, %s26
        %s303 = smul.u32 2, %s26
        %s304 = smul.u32 %s27, 512
        %s305 = sshra.s32 %s304, 7
        %s306 = sand.u32 %s304, 127
        %s307 = smul.addr %s305, 8
        %s308 = scalar_lea.vmem [#allocation3], %s307
        %v309 = vld [vmem:[%s308] sm:$0xff]
        %v310 = vld [vmem:[%s308 + $0x8] sm:$0xff]
        %v311 = vld [vmem:[%s308 + $0x10] sm:$0xff]
        %v312 = vld [vmem:[%s308 + $0x18] sm:$0xff]
        %v313 = vld [vmem:[%s252] sm:$0xff]
        %v314 = vld [vmem:[%s252 + $0x8] sm:$0xff]
        %v315 = vld [vmem:[%s252 + $0x10] sm:$0xff]
        %v316 = vld [vmem:[%s252 + $0x18] sm:$0xff]
        %v317 = vld [vmem:[%s252 + $0x20] sm:$0xff]
        %v318 = vld [vmem:[%s252 + $0x28] sm:$0xff]
        %v319 = vld [vmem:[%s252 + $0x30] sm:$0xff]
        %v320 = vld [vmem:[%s252 + $0x38] sm:$0xff]
        %v321 = vld [vmem:[%s252 + $0x40] sm:$0xff]
        %v322 = vld [vmem:[%s252 + $0x48] sm:$0xff]
        %v323 = vld [vmem:[%s252 + $0x50] sm:$0xff]
        %v324 = vld [vmem:[%s252 + $0x58] sm:$0xff]
        %v325 = vld [vmem:[%s252 + $0x60] sm:$0xff]
        %v326 = vld [vmem:[%s252 + $0x68] sm:$0xff]
        %v327 = vld [vmem:[%s252 + $0x70] sm:$0xff]
        %v328 = vld [vmem:[%s252 + $0x78] sm:$0xff]
        %v329 = vld [vmem:[%s252 + $0x80] sm:$0xff]
        %v330 = vld [vmem:[%s252 + $0x88] sm:$0xff]
        %v331 = vld [vmem:[%s252 + $0x90] sm:$0xff]
        %v332 = vld [vmem:[%s252 + $0x98] sm:$0xff]
        %v333 = vld [vmem:[%s252 + $0xa0] sm:$0xff]
        %v334 = vld [vmem:[%s252 + $0xa8] sm:$0xff]
        %v335 = vld [vmem:[%s252 + $0xb0] sm:$0xff]
        %v336 = vld [vmem:[%s252 + $0xb8] sm:$0xff]
        %v337 = vld [vmem:[%s252 + $0xc0] sm:$0xff]
        %v338 = vld [vmem:[%s252 + $0xc8] sm:$0xff]
        %v339 = vld [vmem:[%s252 + $0xd0] sm:$0xff]
        %v340 = vld [vmem:[%s252 + $0xd8] sm:$0xff]
        %v341 = vld [vmem:[%s252 + $0xe0] sm:$0xff]
        %v342 = vld [vmem:[%s252 + $0xe8] sm:$0xff]
        %v343 = vld [vmem:[%s252 + $0xf0] sm:$0xff]
        %v344 = vld [vmem:[%s252 + $0xf8] sm:$0xff]
        %v345 = vld [vmem:[%s252 + $0x100] sm:$0xff]
        %v346 = vld [vmem:[%s252 + $0x108] sm:$0xff]
        %v347 = vld [vmem:[%s252 + $0x110] sm:$0xff]
        %v348 = vld [vmem:[%s252 + $0x118] sm:$0xff]
        %v349 = vld [vmem:[%s252 + $0x120] sm:$0xff]
        %v350 = vld [vmem:[%s252 + $0x128] sm:$0xff]
        %v351 = vld [vmem:[%s252 + $0x130] sm:$0xff]
        %v352 = vld [vmem:[%s252 + $0x138] sm:$0xff]
        %v353 = vld [vmem:[%s252 + $0x140] sm:$0xff]
        %v354 = vld [vmem:[%s252 + $0x148] sm:$0xff]
        %v355 = vld [vmem:[%s252 + $0x150] sm:$0xff]
        %v356 = vld [vmem:[%s252 + $0x158] sm:$0xff]
        %v357 = vld [vmem:[%s252 + $0x160] sm:$0xff]
        %v358 = vld [vmem:[%s252 + $0x168] sm:$0xff]
        %v359 = vld [vmem:[%s252 + $0x170] sm:$0xff]
        %v360 = vld [vmem:[%s252 + $0x178] sm:$0xff]
        %v361 = vld [vmem:[%s252 + $0x180] sm:$0xff]
        %v362 = vld [vmem:[%s252 + $0x188] sm:$0xff]
        %v363 = vld [vmem:[%s252 + $0x190] sm:$0xff]
        %v364 = vld [vmem:[%s252 + $0x198] sm:$0xff]
        %v365 = vld [vmem:[%s252 + $0x1a0] sm:$0xff]
        %v366 = vld [vmem:[%s252 + $0x1a8] sm:$0xff]
        %v367 = vld [vmem:[%s252 + $0x1b0] sm:$0xff]
        %v368 = vld [vmem:[%s252 + $0x1b8] sm:$0xff]
        %v369 = vld [vmem:[%s252 + $0x1c0] sm:$0xff]
        %v370 = vld [vmem:[%s252 + $0x1c8] sm:$0xff]
        %v371 = vld [vmem:[%s252 + $0x1d0] sm:$0xff]
        %v372 = vld [vmem:[%s252 + $0x1d8] sm:$0xff]
        %v373 = vld [vmem:[%s252 + $0x1e0] sm:$0xff]
        %v374 = vld [vmem:[%s252 + $0x1e8] sm:$0xff]
        %v375 = vld [vmem:[%s252 + $0x1f0] sm:$0xff]
        %v376 = vld [vmem:[%s252 + $0x1f8] sm:$0xff]
        %v377 = vld [vmem:[%s252 + $0x200] sm:$0xff]
        %v378 = vld [vmem:[%s252 + $0x208] sm:$0xff]
        %v379 = vld [vmem:[%s252 + $0x210] sm:$0xff]
        %v380 = vld [vmem:[%s252 + $0x218] sm:$0xff]
        %v381 = vld [vmem:[%s252 + $0x220] sm:$0xff]
        %v382 = vld [vmem:[%s252 + $0x228] sm:$0xff]
        %v383 = vld [vmem:[%s252 + $0x230] sm:$0xff]
        %v384 = vld [vmem:[%s252 + $0x238] sm:$0xff]
        %v385 = vld [vmem:[%s252 + $0x240] sm:$0xff]
        %v386 = vld [vmem:[%s252 + $0x248] sm:$0xff]
        %v387 = vld [vmem:[%s252 + $0x250] sm:$0xff]
        %v388 = vld [vmem:[%s252 + $0x258] sm:$0xff]
        %v389 = vld [vmem:[%s252 + $0x260] sm:$0xff]
        %v390 = vld [vmem:[%s252 + $0x268] sm:$0xff]
        %v391 = vld [vmem:[%s252 + $0x270] sm:$0xff]
        %v392 = vld [vmem:[%s252 + $0x278] sm:$0xff]
        %v393 = vld [vmem:[%s252 + $0x280] sm:$0xff]
        %v394 = vld [vmem:[%s252 + $0x288] sm:$0xff]
        %v395 = vld [vmem:[%s252 + $0x290] sm:$0xff]
        %v396 = vld [vmem:[%s252 + $0x298] sm:$0xff]
        %v397 = vld [vmem:[%s252 + $0x2a0] sm:$0xff]
        %v398 = vld [vmem:[%s252 + $0x2a8] sm:$0xff]
        %v399 = vld [vmem:[%s252 + $0x2b0] sm:$0xff]
        %v400 = vld [vmem:[%s252 + $0x2b8] sm:$0xff]
        %v401 = vld [vmem:[%s252 + $0x2c0] sm:$0xff]
        %v402 = vld [vmem:[%s252 + $0x2c8] sm:$0xff]
        %v403 = vld [vmem:[%s252 + $0x2d0] sm:$0xff]
        %v404 = vld [vmem:[%s252 + $0x2d8] sm:$0xff]
        %v405 = vld [vmem:[%s252 + $0x2e0] sm:$0xff]
        %v406 = vld [vmem:[%s252 + $0x2e8] sm:$0xff]
        %v407 = vld [vmem:[%s252 + $0x2f0] sm:$0xff]
        %v408 = vld [vmem:[%s252 + $0x2f8] sm:$0xff]
        %v409 = vld [vmem:[%s252 + $0x300] sm:$0xff]
        %v410 = vld [vmem:[%s252 + $0x308] sm:$0xff]
        %v411 = vld [vmem:[%s252 + $0x310] sm:$0xff]
        %v412 = vld [vmem:[%s252 + $0x318] sm:$0xff]
        %v413 = vld [vmem:[%s252 + $0x320] sm:$0xff]
        %v414 = vld [vmem:[%s252 + $0x328] sm:$0xff]
        %v415 = vld [vmem:[%s252 + $0x330] sm:$0xff]
        %v416 = vld [vmem:[%s252 + $0x338] sm:$0xff]
        %v417 = vld [vmem:[%s252 + $0x340] sm:$0xff]
        %v418 = vld [vmem:[%s252 + $0x348] sm:$0xff]
        %v419 = vld [vmem:[%s252 + $0x350] sm:$0xff]
        %v420 = vld [vmem:[%s252 + $0x358] sm:$0xff]
        %v421 = vld [vmem:[%s252 + $0x360] sm:$0xff]
        %v422 = vld [vmem:[%s252 + $0x368] sm:$0xff]
        %v423 = vld [vmem:[%s252 + $0x370] sm:$0xff]
        %v424 = vld [vmem:[%s252 + $0x378] sm:$0xff]
        %v425 = vld [vmem:[%s252 + $0x380] sm:$0xff]
        %v426 = vld [vmem:[%s252 + $0x388] sm:$0xff]
        %v427 = vld [vmem:[%s252 + $0x390] sm:$0xff]
        %v428 = vld [vmem:[%s252 + $0x398] sm:$0xff]
        %v429 = vld [vmem:[%s252 + $0x3a0] sm:$0xff]
        %v430 = vld [vmem:[%s252 + $0x3a8] sm:$0xff]
        %v431 = vld [vmem:[%s252 + $0x3b0] sm:$0xff]
        %v432 = vld [vmem:[%s252 + $0x3b8] sm:$0xff]
        %v433 = vld [vmem:[%s252 + $0x3c0] sm:$0xff]
        %v434 = vld [vmem:[%s252 + $0x3c8] sm:$0xff]
        %v435 = vld [vmem:[%s252 + $0x3d0] sm:$0xff]
        %v436 = vld [vmem:[%s252 + $0x3d8] sm:$0xff]
        %v437 = vld [vmem:[%s252 + $0x3e0] sm:$0xff]
        %v438 = vld [vmem:[%s252 + $0x3e8] sm:$0xff]
        %v439 = vld [vmem:[%s252 + $0x3f0] sm:$0xff]
        %v440 = vld [vmem:[%s252 + $0x3f8] sm:$0xff]
        %441 = vmatprep.subr.mxu0 %v344
        %442 = vmatpush1.msra.mxu0 %v343
        %443 = vmatprep.subr.mxu0 %v342
        %444 = vmatpush1.msra.mxu0 %v341
        %445 = vmatprep.subr.mxu0 %v340
        %446 = vmatpush1.msra.mxu0 %v339
        %447 = vmatprep.subr.mxu0 %v338
        %448 = vmatpush1.msra.mxu0 %v337
        %449 = vmatprep.subr.mxu0 %v336
        %450 = vmatpush1.msra.mxu0 %v335
        %451 = vmatprep.subr.mxu0 %v334
        %452 = vmatpush1.msra.mxu0 %v333
        %453 = vmatprep.subr.mxu0 %v332
        %454 = vmatpush1.msra.mxu0 %v331
        %455 = vmatprep.subr.mxu0 %v330
        %456 = vmatpush1.msra.mxu0 %v329
        %457 = vmatprep.subr.mxu0 %v328
        %458 = vmatpush1.msra.mxu0 %v327
        %459 = vmatprep.subr.mxu0 %v326
        %460 = vmatpush1.msra.mxu0 %v325
        %461 = vmatprep.subr.mxu0 %v324
        %462 = vmatpush1.msra.mxu0 %v323
        %463 = vmatprep.subr.mxu0 %v322
        %464 = vmatpush1.msra.mxu0 %v321
        %465 = vmatprep.subr.mxu0 %v320
        %466 = vmatpush1.msra.mxu0 %v319
        %467 = vmatprep.subr.mxu0 %v318
        %468 = vmatpush1.msra.mxu0 %v317
        %469 = vmatprep.subr.mxu0 %v316
        %470 = vmatpush1.msra.mxu0 %v315
        %471 = vmatprep.subr.mxu0 %v314
        %472 = vmatpush1.msra.mxu0 %v313
        %473 = vmatprep.subr.mxu0 %v376
        %474 = vmatpush2.msra.mxu0 %v375
        %475 = vmatprep.subr.mxu0 %v374
        %476 = vmatpush2.msra.mxu0 %v373
        %477 = vmatprep.subr.mxu0 %v372
        %478 = vmatpush2.msra.mxu0 %v371
        %479 = vmatprep.subr.mxu0 %v370
        %480 = vmatpush2.msra.mxu0 %v369
        %481 = vmatprep.subr.mxu0 %v368
        %482 = vmatpush2.msra.mxu0 %v367
        %483 = vmatprep.subr.mxu0 %v366
        %484 = vmatpush2.msra.mxu0 %v365
        %485 = vmatprep.subr.mxu0 %v364
        %486 = vmatpush2.msra.mxu0 %v363
        %487 = vmatprep.subr.mxu0 %v362
        %488 = vmatpush2.msra.mxu0 %v361
        %489 = vmatprep.subr.mxu0 %v360
        %490 = vmatpush2.msra.mxu0 %v359
        %491 = vmatprep.subr.mxu0 %v358
        %492 = vmatpush2.msra.mxu0 %v357
        %493 = vmatprep.subr.mxu0 %v356
        %494 = vmatpush2.msra.mxu0 %v355
        %495 = vmatprep.subr.mxu0 %v354
        %496 = vmatpush2.msra.mxu0 %v353
        %497 = vmatprep.subr.mxu0 %v352
        %498 = vmatpush2.msra.mxu0 %v351
        %499 = vmatprep.subr.mxu0 %v350
        %500 = vmatpush2.msra.mxu0 %v349
        %501 = vmatprep.subr.mxu0 %v348
        %502 = vmatpush2.msra.mxu0 %v347
        %503 = vmatprep.subr.mxu0 %v346
        %504 = vmatpush2.msra.mxu0 %v345
        %505 = vmatprep.mubr.f32.mxu0 %v310
        %506 = vmatmul.mubr.f32.gmra.mxu0 %v309
        %v507 = vpop.f32.mrf.mxu0
        %v508 = vadd.f32 0.0, %v507
        %v509 = vpop.f32.mrf.mxu0
        %v510 = vadd.f32 0.0, %v509
        %511 = vdwg.mxu0
        %512 = vmatprep.subr.mxu0 %v408
        %513 = vmatpush1.msra.mxu0 %v407
        %514 = vmatprep.subr.mxu0 %v406
        %515 = vmatpush1.msra.mxu0 %v405
        %516 = vmatprep.subr.mxu0 %v404
        %517 = vmatpush1.msra.mxu0 %v403
        %518 = vmatprep.subr.mxu0 %v402
        %519 = vmatpush1.msra.mxu0 %v401
        %520 = vmatprep.subr.mxu0 %v400
        %521 = vmatpush1.msra.mxu0 %v399
        %522 = vmatprep.subr.mxu0 %v398
        %523 = vmatpush1.msra.mxu0 %v397
        %524 = vmatprep.subr.mxu0 %v396
        %525 = vmatpush1.msra.mxu0 %v395
        %526 = vmatprep.subr.mxu0 %v394
        %527 = vmatpush1.msra.mxu0 %v393
        %528 = vmatprep.subr.mxu0 %v392
        %529 = vmatpush1.msra.mxu0 %v391
        %530 = vmatprep.subr.mxu0 %v390
        %531 = vmatpush1.msra.mxu0 %v389
        %532 = vmatprep.subr.mxu0 %v388
        %533 = vmatpush1.msra.mxu0 %v387
        %534 = vmatprep.subr.mxu0 %v386
        %535 = vmatpush1.msra.mxu0 %v385
        %536 = vmatprep.subr.mxu0 %v384
        %537 = vmatpush1.msra.mxu0 %v383
        %538 = vmatprep.subr.mxu0 %v382
        %539 = vmatpush1.msra.mxu0 %v381
        %540 = vmatprep.subr.mxu0 %v380
        %541 = vmatpush1.msra.mxu0 %v379
        %542 = vmatprep.subr.mxu0 %v378
        %543 = vmatpush1.msra.mxu0 %v377
        %544 = vmatprep.subr.mxu0 %v440
        %545 = vmatpush2.msra.mxu0 %v439
        %546 = vmatprep.subr.mxu0 %v438
        %547 = vmatpush2.msra.mxu0 %v437
        %548 = vmatprep.subr.mxu0 %v436
        %549 = vmatpush2.msra.mxu0 %v435
        %550 = vmatprep.subr.mxu0 %v434
        %551 = vmatpush2.msra.mxu0 %v433
        %552 = vmatprep.subr.mxu0 %v432
        %553 = vmatpush2.msra.mxu0 %v431
        %554 = vmatprep.subr.mxu0 %v430
        %555 = vmatpush2.msra.mxu0 %v429
        %556 = vmatprep.subr.mxu0 %v428
        %557 = vmatpush2.msra.mxu0 %v427
        %558 = vmatprep.subr.mxu0 %v426
        %559 = vmatpush2.msra.mxu0 %v425
        %560 = vmatprep.subr.mxu0 %v424
        %561 = vmatpush2.msra.mxu0 %v423
        %562 = vmatprep.subr.mxu0 %v422
        %563 = vmatpush2.msra.mxu0 %v421
        %564 = vmatprep.subr.mxu0 %v420
        %565 = vmatpush2.msra.mxu0 %v419
        %566 = vmatprep.subr.mxu0 %v418
        %567 = vmatpush2.msra.mxu0 %v417
        %568 = vmatprep.subr.mxu0 %v416
        %569 = vmatpush2.msra.mxu0 %v415
        %570 = vmatprep.subr.mxu0 %v414
        %571 = vmatpush2.msra.mxu0 %v413
        %572 = vmatprep.subr.mxu0 %v412
        %573 = vmatpush2.msra.mxu0 %v411
        %574 = vmatprep.subr.mxu0 %v410
        %575 = vmatpush2.msra.mxu0 %v409
        %576 = vmatprep.mubr.f32.mxu0 %v312
        %577 = vmatmul.mubr.f32.gmra.mxu0 %v311
        %v578 = vpop.f32.mrf.mxu0
        %v579 = vadd.f32 %v508, %v578
        %v580 = vpop.f32.mrf.mxu0
        %v581 = vadd.f32 %v510, %v580
        %582 = vdwg.mxu0
        %p583 = scmp.eq.s32.totalorder %s27, 0
        // Predicated region
        $region49: #{tpu_custom_call.1} parent=35 // pred_check
          %p584 = pneg %p583
        $region50: #{tpu_custom_call.1} parent=35 // pred_check_branch
          %586 = sbr.rel (%p584) target = $region52
        $region51: #{tpu_custom_call.1} parent=35 // pred_region
          %587 = vst [vmem:[#allocation2] sm:$0xff] %v579
          %588 = vst [vmem:[#allocation2 + $0x8] sm:$0xff] %v581
        $region52: #{tpu_custom_call.1} parent=35 // pred_fallthru
          _
        %p589 = scmp.ne.s32.totalorder %s27, 0
        // Predicated region
        $region53: #{tpu_custom_call.1} parent=35 // pred_check
          %p590 = pneg %p589
        $region54: #{tpu_custom_call.1} parent=35 // pred_check_branch
          %592 = sbr.rel (%p590) target = $region56
        $region55: #{tpu_custom_call.1} parent=35 // pred_region
          %v593 = vld [vmem:[#allocation2] sm:$0xff]
          %v594 = vld [vmem:[#allocation2 + $0x8] sm:$0xff]
          %v595 = vadd.f32 %v593, %v579
          %v596 = vadd.f32 %v594, %v581
          %597 = vst [vmem:[#allocation2] sm:$0xff] %v595
          %598 = vst [vmem:[#allocation2 + $0x8] sm:$0xff] %v596
        $region56: #{tpu_custom_call.1} parent=35 // pred_fallthru
          _
        // Predicated region
        $region57: #{tpu_custom_call.1} parent=35 // pred_check
          %p599 = pneg %p583
        $region58: #{tpu_custom_call.1} parent=35 // pred_check_branch
          %601 = sbr.rel (%p599) target = $region60
        $region59: #{tpu_custom_call.1} parent=35 // pred_region
          %v602 = vld [vmem:[#allocation2] sm:$0xff]
          %v603 = vld [vmem:[#allocation2 + $0x8] sm:$0xff]
          %v604 = vrot.slane %v602, 4
          %v605 = vadd.f32 %v602, %v604
          %v606 = vrot.slane %v605, 2
          %v607 = vadd.f32 %v605, %v606
          %v608 = vrot.slane %v607, 1
          %v609 = vadd.f32 %v607, %v608
          %v610 = vrot.slane %v603, 4
          %v611 = vadd.f32 %v603, %v610
          %v612 = vrot.slane %v611, 2
          %v613 = vadd.f32 %v611, %v612
          %v614 = vrot.slane %v613, 1
          %v615 = vadd.f32 %v613, %v614
          %v616 = vrcp.pop 8.0
          %v617 = vmul.f32 %v609, %v616
          %v618 = vmul.f32 %v615, %v616
          %v619 = vsub.f32 %v602, %v617
          %v620 = vsub.f32 %v603, %v618
          %v621 = vmul.f32 %v619, %v619
          %v622 = vmul.f32 %v620, %v620
          %v623 = vrot.slane %v621, 4
          %v624 = vadd.f32 %v621, %v623
          %v625 = vrot.slane %v624, 2
          %v626 = vadd.f32 %v624, %v625
          %v627 = vrot.slane %v626, 1
          %v628 = vadd.f32 %v626, %v627
          %v629 = vrot.slane %v622, 4
          %v630 = vadd.f32 %v622, %v629
          %v631 = vrot.slane %v630, 2
          %v632 = vadd.f32 %v630, %v631
          %v633 = vrot.slane %v632, 1
          %v634 = vadd.f32 %v632, %v633
          %v635 = vmul.f32 %v628, %v616
          %v636 = vmul.f32 %v634, %v616
          %v637 = vld [vmem:[%s261] sm:$0x3]
          %v638 = vadd.f32 %v635, 1e-05
          %v639 = vadd.f32 %v636, 1e-05
          %v640 = vrsqrt.pop %v638
          %v641 = vrsqrt.pop %v639
          %v644 = vcombine.low %v640, %v641
          %v646 = vunpack.c.l.s4 1966171168
          %v647 = vunpack.c.0.s8 %v646
          %v648 = vlaneseq
          %v649 = vshrl.u32 %v648, 7
          %v650 = vsub.s32 %v647, %v649
          %v651 = vrot.slane %v644, %v650
          %v653 = vunpack.c.l.s4 1966171168
          %v654 = vunpack.c.0.s8 %v653
          %v655 = vlaneseq
          %v656 = vshrl.u32 %v655, 7
          %v657 = vsub.s32 %v654, %v656
          %v658 = vrot.slane %v651, %v657
          %v660 = vmul.f32 %v637, %v658
          %v662 = vlaneseq
          %v663 = vshrl.u32 %v662, 7
          %v664 = vsub.s32 0, %v663
          %v665 = vrot.slane %v660, %v664
          %v666 = vlaneseq
          %v667 = vshrl.u32 %v666, 7
          %v668 = vsub.s32 1, %v667
          %v669 = vrot.slane %v660, %v668
          %v672 = vmul.f32 %v619, %v665
          %v673 = vmul.f32 %v620, %v669
          %v674 = vld [vmem:[%s301] sm:$0x3]
          %v676 = vlaneseq
          %v677 = vshrl.u32 %v676, 7
          %v678 = vsub.s32 0, %v677
          %v679 = vrot.slane %v674, %v678
          %v680 = vlaneseq
          %v681 = vshrl.u32 %v680, 7
          %v682 = vsub.s32 1, %v681
          %v683 = vrot.slane %v674, %v682
          %v686 = vadd.f32 %v672, %v679
          %v687 = vadd.f32 %v673, %v683
          %s688 = smul.u32 %s26, 256
          %s689 = sshra.s32 %s688, 7
          %s690 = sand.u32 %s688, 127
          %s691 = smul.addr %s689, 8
          %s692 = scalar_lea.vmem [#allocation3], %s691
          %v693 = vld [vmem:[%s692] sm:$0xff]
          %v694 = vld [vmem:[%s692 + $0x8] sm:$0xff]
          %v695 = vxor.u32 %v686, 2147483648
          %v696 = vxor.u32 %v687, 2147483648
          %v697 = vmul.f32 %v695, 1.442695
          %v698 = vpow.pop %v697
          %v699 = vmul.f32 %v696, 1.442695
          %v700 = vpow.pop %v699
          %v701 = vadd.f32 %v698, 1.0
          %v702 = vadd.f32 %v700, 1.0
          %v703 = vrcp.pop %v701
          %v704 = vmul.f32 1.0, %v703
          %v705 = vrcp.pop %v702
          %v706 = vmul.f32 1.0, %v705
          %v707 = vmul.f32 %v693, %v704
          %v708 = vmul.f32 %v694, %v706
          %709 = vst [vmem:[%s294] sm:$0xff] %v707
          %710 = vst [vmem:[%s294 + $0x8] sm:$0xff] %v708
        $region60: #{tpu_custom_call.1} parent=35 // pred_fallthru
          _
        %s711 = sand.u32 %s143, 1
        %s712 = scalar_lea.sflag [#allocation5], %s711
        %s713 = sand.u32 %s143, 1
        %s714 = smul.addr %s713, 16
        %s715 = scalar_lea.vmem [#allocation9], %s714
        // Predicated region
        $region61: #{tpu_custom_call.1} parent=35 // pred_check
          %p716 = pneg %p153
        $region62: #{tpu_custom_call.1} parent=35 // pred_check_branch
          %718 = sbr.rel (%p716) target = $region64
        $region63: #{tpu_custom_call.1} parent=35 // pred_region
          %s719 = smul.u32 2, %s26
          %s721 = ssub.s32 256, 256
          %722 = vsyncadd %s712, %s721
          %s723 = smul.addr %s719, 128
          %s724 = scalar_lea.hbm %s4, %s723
          %s726 = sshll.u32 %s715, 4
          %s727 = int_to_ptr.vmem [resolvable:$true] %s726
          %729 = dma.vmem_to_hbm [thread:$0]  %s727, 256, %s724, %s712
        $region64: #{tpu_custom_call.1} parent=35 // pred_fallthru
          _
      $region36: #{tpu_custom_call.1} parent=5 // pred_fallthru
        _
      %p730 = scmp.le.s32.totalorder 2, %s17
      // Predicated region
      $region65: #{tpu_custom_call.1} parent=5 // pred_check
        %p731 = pneg %p730
      $region66: #{tpu_custom_call.1} parent=5 // pred_check_branch
        %733 = sbr.rel (%p731) target = $region68
      $region67: #{tpu_custom_call.1} parent=5 // pred_region
        %s734 = ssub.s32 %s17, 2
        // Predicated region
        $region69: #{tpu_custom_call.1} parent=67 // pred_check
          %p735 = pneg %p159
        $region70: #{tpu_custom_call.1} parent=67 // pred_check_branch
          %737 = sbr.rel (%p735) target = $region72
        $region71: #{tpu_custom_call.1} parent=67 // pred_region
          %s738 = sand.u32 %s144, 1
          %s739 = scalar_lea.sflag [#allocation5], %s738
          %s740 = sand.u32 %s144, 1
          %s741 = smul.addr %s740, 16
          %s742 = scalar_lea.vmem [#allocation9], %s741
          %743 = dma.done %s739, 256
        $region72: #{tpu_custom_call.1} parent=67 // pred_fallthru
          _
      $region68: #{tpu_custom_call.1} parent=5 // pred_fallthru
        _
    $region6: #{tpu_custom_call.1} parent=1 // loop_footer
      %s21 = sadd.s32 1, %s17
    $region7: #{tpu_custom_call.1} parent=1 // loop_footer_branch
      %16 = sbr.rel target = $region3
    $region8: #{tpu_custom_call.1} parent=1 // loop_exit
      _
    %744 = vsyncpa [#allocation4], 1
    %s745 = scalar_lea.sflag [#allocation4], 1
    %746 = vsyncpa %s745, 1
    %747 = vsyncpa [#allocation7], 1
    %s748 = scalar_lea.sflag [#allocation7], 1
    %749 = vsyncpa %s748, 1
    %750 = vsyncpa [#allocation5], 1
    %s751 = scalar_lea.sflag [#allocation5], 1
    %752 = vsyncpa %s751, 1

</llo_original>
